<compile_context>
chip_gen: v7x
topology: tpu7x:2x2x1
jax: 0.10.0
libtpu: 0.0.40
codegen_flags: <defaults>
</compile_context>

<pallas_src>
import jax
import jax.numpy as jnp
from jax.experimental import pallas as pl
from jax.experimental.pallas import tpu as pltpu


# ----------------------------- kernel factory ------------------------------ #

def make_kernel(num_layers, num_f_maps):
    L, C = num_layers, num_f_maps

    def kernel(x_ref, w_in_ref, b_in_ref, w_comb_ref, b_comb_ref,
               w_out_ref, b_out_ref, o_ref):
        T = x_ref.shape[1]

        def shift_zero(v, s):
            """out[t] = v[t - s] with zero fill outside [0, T).  `s` is a static int."""
            if s == 0:
                return v
            if s >= T or s <= -T:
                return jnp.zeros_like(v)
            z = jnp.zeros((abs(s), v.shape[1]), v.dtype)
            if s > 0:
                return jnp.concatenate([z, v[:T - s, :]], axis=0)
            return jnp.concatenate([v[-s:, :], z], axis=0)

        # 1x1 input conv == matmul over channels (bf16 operands, f32 accumulate).
        x = x_ref[0].astype(jnp.bfloat16)                      # (T, dim)
        f = jnp.dot(x, w_in_ref[...],
                    preferred_element_type=jnp.float32) + b_in_ref[...]  # (T, C) f32

        for i in range(L):  # static unroll; dilations are Python constants
            d1 = 2 ** (L - 1 - i)
            d2 = 2 ** i
            f_in = f
            fb = f.astype(jnp.bfloat16)

            # Lane-concat of the 5 shifted taps the composed weight expects:
            #   [f(t-d1), f(t), f(t+d1), f(t-d2), f(t+d2)]   -> (T, 5C)
            stack = jnp.concatenate(
                [shift_zero(fb, d1), fb, shift_zero(fb, -d1),
                 shift_zero(fb, d2), shift_zero(fb, -d2)], axis=-1)

            # Composed (dilated taps -> 1x1 fusion) matmul: one MXU call per layer.
            fused = jnp.dot(stack, w_comb_ref[i],
                            preferred_element_type=jnp.float32) + b_comb_ref[i]

            f = jnp.maximum(fused, 0.0)
            # TODO(synk): nn.Dropout is identity at inference; training-mode random
            # masking is intentionally not modeled here.
            f = f + f_in

        # Output 1x1 conv into a lane-dense (padded-to-128) class axis.
        o_ref[0] = (jnp.dot(f.astype(jnp.bfloat16), w_out_ref[...],
                            preferred_element_type=jnp.float32) + b_out_ref[...])

    return kernel


# ------------------------------ host wrapper -------------------------------- #

def prediction_generation(x_ncw, kernel_params, num_layers, num_f_maps, num_classes):
    """x_ncw: (N, dim, T) float32 (PyTorch NCW).  Returns (N, num_classes, T)."""
    N, dim, T = x_ncw.shape
    C, L = num_f_maps, num_layers
    x = jnp.transpose(x_ncw, (0, 2, 1))  # -> (N, T, dim)  kernel layout

    (w_in, b_in, w_comb, b_comb, w_out, b_out) = kernel_params
    ncp = w_out.shape[-1]  # padded class count (multiple of 128)
    weight_args = (w_in, b_in, w_comb, b_comb, w_out, b_out)

    def full_spec(a):
        nd = a.ndim
        return pl.BlockSpec(a.shape, lambda n, nd=nd: (0,) * nd)

    flops = int(N * (2 * T * dim * C + 10 * L * T * C * C + 2 * T * C * ncp))
    bytes_accessed = int(x.size * x.dtype.itemsize
                         + sum(int(a.size) * a.dtype.itemsize for a in weight_args)
                         + N * T * ncp * 4)

    # TODO(synk): for very long sequences on v7x (64 MiB VMEM) the whole-T-resident
    # design should be tiled over T (with dilation halos); not needed at these sizes.
    kernel = make_kernel(num_layers, num_f_maps)
    out = pl.pallas_call(
        kernel,
        out_shape=jax.ShapeDtypeStruct((N, T, ncp), jnp.float32),
        grid=(N,),
        in_specs=[pl.BlockSpec((1, T, dim), lambda n: (n, 0, 0))]
                 + [full_spec(a) for a in weight_args],
        out_specs=pl.BlockSpec((1, T, ncp), lambda n: (n, 0, 0)),
        compiler_params=pltpu.CompilerParams(
            dimension_semantics=("parallel",),
            vmem_limit_bytes=48 * 1024 * 1024),
        cost_estimate=pl.CostEstimate(flops=flops, transcendentals=0,
                                      bytes_accessed=bytes_accessed),
    )(x, *weight_args)

    # Drop the lane padding and go back to (N, num_classes, T).
    return jnp.transpose(out[:, :, :num_classes], (0, 2, 1))


# --------------------------- params & reference ----------------------------- #

def init_params(key, num_layers, num_f_maps, dim, num_classes):
    """Deterministic synthetic params in PyTorch Conv1d layout + composed kernel layout."""
    L, C = num_layers, num_f_maps
    ks = jax.random.split(key, 10)
    s = 0.1
    W_in = jax.random.normal(ks[0], (C, dim, 1), jnp.float32) * s
    b_in = jax.random.normal(ks[1], (C,), jnp.float32) * s
    Wd1 = jax.random.normal(ks[2], (L, C, C, 3), jnp.float32) * s
    bd1 = jax.random.normal(ks[3], (L, C), jnp.float32) * s
    Wd2 = jax.random.normal(ks[4], (L, C, C, 3), jnp.float32) * s
    bd2 = jax.random.normal(ks[5], (L, C), jnp.float32) * s
    Wf = jax.random.normal(ks[6], (L, C, 2 * C, 1), jnp.float32) * s
    bf = jax.random.normal(ks[7], (L, C), jnp.float32) * s
    W_out = jax.random.normal(ks[8], (num_classes, C, 1), jnp.float32) * s
    b_out = jax.random.normal(ks[9], (num_classes,), jnp.float32) * s

    torch_params = (W_in, b_in, Wd1, bd1, Wd2, bd2, Wf, bf, W_out, b_out)

    # Compose (dilated taps -> 1x1 fusion) per layer in f32 on the host.
    # With (T, C_in) @ (C_in, C_out) convention:
    #   fused[t] = f[t-d1]@(A0@WfA) + f[t]@(A1@WfA + B1@WfB) + f[t+d1]@(A2@WfA)
    #            + f[t-d2]@(B0@WfB) + f[t+d2]@(B2@WfB)
    #            + (bd1@WfA + bd2@WfB + bf)
    w_comb_list, b_comb_list = [], []
    for i in range(L):
        A = [Wd1[i, :, :, k].T for k in range(3)]   # (C_in, C_out)
        B = [Wd2[i, :, :, k].T for k in range(3)]
        WfA = Wf[i, :, :C, 0].T                     # (C, C)
        WfB = Wf[i, :, C:, 0].T                     # (C, C)
        blocks = [A[0] @ WfA,
                  A[1] @ WfA + B[1] @ WfB,
                  A[2] @ WfA,
                  B[0] @ WfB,
                  B[2] @ WfB]
        w_comb_list.append(jnp.concatenate(blocks, axis=0))        # (5C, C)
        b_comb_list.append(bd1[i] @ WfA + bd2[i] @ WfB + bf[i])    # (C,)
    w_comb = jnp.stack(w_comb_list, axis=0)   # (L, 5C, C)
    b_comb = jnp.stack(b_comb_list, axis=0)   # (L, C)

    ncp = ((num_classes + 127) // 128) * 128
    w_out_pad = jnp.zeros((C, ncp), jnp.float32).at[:, :num_classes].set(W_out[:, :, 0].T)
    b_out_pad = jnp.zeros((1, ncp), jnp.float32).at[:, :num_classes].set(b_out[None, :])

    kernel_params = (
        W_in[:, :, 0].T.astype(jnp.bfloat16),   # (dim, C)   bf16
        b_in[None, :],                          # (1, C)     f32
        w_comb.astype(jnp.bfloat16),            # (L, 5C, C) bf16
        b_comb[:, None, :],                     # (L, 1, C)  f32
        w_out_pad.astype(jnp.bfloat16),         # (C, ncp)   bf16
        b_out_pad,                              # (1, ncp)   f32
    )
    return torch_params, kernel_params


def _conv1d_ref(x, w, b, padding, dilation):
    out = jax.lax.conv_general_dilated(
        x, w, window_strides=(1,), padding=[(padding, padding)],
        rhs_dilation=(dilation,), dimension_numbers=("NCH", "OIH", "NCH"))
    return out + b[None, :, None]


def reference_forward(x, torch_params, num_layers):
    (W_in, b_in, Wd1, bd1, Wd2, bd2, Wf, bf, W_out, b_out) = torch_params
    L = num_layers
    f = _conv1d_ref(x, W_in, b_in, 0, 1)
    for i in range(L):
        d1 = 2 ** (L - 1 - i)
        d2 = 2 ** i
        f_in = f
        a = _conv1d_ref(f, Wd1[i], bd1[i], d1, d1)
        b = _conv1d_ref(f, Wd2[i], bd2[i], d2, d2)
        f = _conv1d_ref(jnp.concatenate([a, b], axis=1), Wf[i], bf[i], 0, 1)
        f = jax.nn.relu(f)
        f = f + f_in  # dropout is identity at inference
    return _conv1d_ref(f, W_out, b_out, 0, 1)


# ----------------------------------- main ----------------------------------- #

if __name__ == "__main__":
    num_layers, num_f_maps, dim, num_classes = 3, 32, 8, 6
    N, T = 2, 16

    key = jax.random.PRNGKey(0)
    kx, kp = jax.random.split(key)
    x = jax.random.normal(kx, (N, dim, T), jnp.float32)  # PyTorch NCW input
    torch_params, kernel_params = init_params(kp, num_layers, num_f_maps, dim, num_classes)

    out = prediction_generation(x, kernel_params, num_layers, num_f_maps, num_classes)
    out = jax.block_until_ready(out)

    ref = reference_forward(x, torch_params, num_layers)
    assert out.shape == (N, num_classes, T), out.shape
    max_err = float(jnp.max(jnp.abs(out - ref)))
    # bf16 matmuls on the MXU (f32 accumulate) vs an all-f32 reference -> loosened tolerance.
    assert jnp.allclose(out, ref, atol=5e-2, rtol=5e-2), f"max_err={max_err}"

    print("KERNEL_OK")
</pallas_src>

<mosaic_0001>
module attributes {stable_mosaic.version = 11 : i64} {
  func.func @kernel(%arg0: i32, %arg1: memref<1x16x8xf32, #tpu.memory_space<vmem>>, %arg2: memref<8x32xbf16, #tpu.memory_space<vmem>>, %arg3: memref<1x32xf32, #tpu.memory_space<vmem>>, %arg4: memref<3x160x32xbf16, #tpu.memory_space<vmem>>, %arg5: memref<3x1x32xf32, #tpu.memory_space<vmem>>, %arg6: memref<32x128xbf16, #tpu.memory_space<vmem>>, %arg7: memref<1x128xf32, #tpu.memory_space<vmem>>, %arg8: memref<1x16x128xf32, #tpu.memory_space<vmem>>) attributes {dimension_semantics = [#tpu.dimension_semantics<parallel>], iteration_bounds = array<i64: 2>, scalar_prefetch = 0 : i64, scratch_operands = 0 : i64, tpu.core_type = #tpu.core_type<tc>, window_params = [{transform_indices = @transform_0, window_bounds = array<i64: 1, 16, 8>}, {pipeline_mode = #tpu.pipeline_mode<synchronous>, transform_indices = @transform_1, window_bounds = array<i64: 8, 32>}, {pipeline_mode = #tpu.pipeline_mode<synchronous>, transform_indices = @transform_2, window_bounds = array<i64: 1, 32>}, {pipeline_mode = #tpu.pipeline_mode<synchronous>, transform_indices = @transform_3, window_bounds = array<i64: 3, 160, 32>}, {pipeline_mode = #tpu.pipeline_mode<synchronous>, transform_indices = @transform_4, window_bounds = array<i64: 3, 1, 32>}, {pipeline_mode = #tpu.pipeline_mode<synchronous>, transform_indices = @transform_5, window_bounds = array<i64: 32, 128>}, {pipeline_mode = #tpu.pipeline_mode<synchronous>, transform_indices = @transform_6, window_bounds = array<i64: 1, 128>}, {transform_indices = @transform_7, window_bounds = array<i64: 1, 16, 128>}]} {
    %c0 = arith.constant 0 : index
    %c0_0 = arith.constant 0 : index
    %c0_1 = arith.constant 0 : index
    %0 = vector.load %arg1[%c0, %c0_0, %c0_1] : memref<1x16x8xf32, #tpu.memory_space<vmem>>, vector<1x16x8xf32>
    %1 = vector.shape_cast %0 : vector<1x16x8xf32> to vector<16x8xf32>
    %2 = arith.truncf %1 : vector<16x8xf32> to vector<16x8xbf16>
    %c0_2 = arith.constant 0 : index
    %c0_3 = arith.constant 0 : index
    %3 = vector.load %arg2[%c0_2, %c0_3] : memref<8x32xbf16, #tpu.memory_space<vmem>>, vector<8x32xbf16>
    %cst = arith.constant dense<0.000000e+00> : vector<16x32xf32>
    %4 = tpu.matmul %2, %3, %cst {dimension_numbers = #tpu.dot_dimension_numbers<[1], [0], [0], [1], [0, 0, 1, 1], [], []>} : vector<16x8xbf16>, vector<8x32xbf16>, vector<16x32xf32> -> vector<16x32xf32>
    %c0_4 = arith.constant 0 : index
    %c0_5 = arith.constant 0 : index
    %5 = vector.load %arg3[%c0_4, %c0_5] : memref<1x32xf32, #tpu.memory_space<vmem>>, vector<1x32xf32>
    %6 = vector.broadcast %5 : vector<1x32xf32> to vector<16x32xf32>
    %7 = arith.addf %4, %6 : vector<16x32xf32>
    %8 = arith.truncf %7 : vector<16x32xf32> to vector<16x32xbf16>
    %cst_6 = arith.constant 0.000000e+00 : bf16
    %9 = vector.broadcast %cst_6 : bf16 to vector<4x32xbf16>
    %10 = vector.extract_strided_slice %8 {offsets = [0, 0], sizes = [12, 32], strides = [1, 1]} : vector<16x32xbf16> to vector<12x32xbf16>
    %11 = tpu.concatenate %9, %10 in 0 : vector<4x32xbf16>, vector<12x32xbf16> -> vector<16x32xbf16>
    %cst_7 = arith.constant 0.000000e+00 : bf16
    %12 = vector.broadcast %cst_7 : bf16 to vector<4x32xbf16>
    %13 = vector.extract_strided_slice %8 {offsets = [4, 0], sizes = [12, 32], strides = [1, 1]} : vector<16x32xbf16> to vector<12x32xbf16>
    %14 = tpu.concatenate %13, %12 in 0 : vector<12x32xbf16>, vector<4x32xbf16> -> vector<16x32xbf16>
    %cst_8 = arith.constant 0.000000e+00 : bf16
    %15 = vector.broadcast %cst_8 : bf16 to vector<1x32xbf16>
    %16 = vector.extract_strided_slice %8 {offsets = [0, 0], sizes = [15, 32], strides = [1, 1]} : vector<16x32xbf16> to vector<15x32xbf16>
    %17 = tpu.concatenate %15, %16 in 0 : vector<1x32xbf16>, vector<15x32xbf16> -> vector<16x32xbf16>
    %cst_9 = arith.constant 0.000000e+00 : bf16
    %18 = vector.broadcast %cst_9 : bf16 to vector<1x32xbf16>
    %19 = vector.extract_strided_slice %8 {offsets = [1, 0], sizes = [15, 32], strides = [1, 1]} : vector<16x32xbf16> to vector<15x32xbf16>
    %20 = tpu.concatenate %19, %18 in 0 : vector<15x32xbf16>, vector<1x32xbf16> -> vector<16x32xbf16>
    %21 = tpu.concatenate %11, %8, %14, %17, %20 in 1 : vector<16x32xbf16>, vector<16x32xbf16>, vector<16x32xbf16>, vector<16x32xbf16>, vector<16x32xbf16> -> vector<16x160xbf16>
    %c0_10 = arith.constant 0 : index
    %c0_11 = arith.constant 0 : index
    %c0_12 = arith.constant 0 : index
    %22 = vector.load %arg4[%c0_10, %c0_11, %c0_12] : memref<3x160x32xbf16, #tpu.memory_space<vmem>>, vector<1x160x32xbf16>
    %23 = vector.shape_cast %22 : vector<1x160x32xbf16> to vector<160x32xbf16>
    %cst_13 = arith.constant dense<0.000000e+00> : vector<16x32xf32>
    %24 = tpu.matmul %21, %23, %cst_13 {dimension_numbers = #tpu.dot_dimension_numbers<[1], [0], [0], [1], [0, 0, 1, 1], [], []>} : vector<16x160xbf16>, vector<160x32xbf16>, vector<16x32xf32> -> vector<16x32xf32>
    %c0_14 = arith.constant 0 : index
    %c0_15 = arith.constant 0 : index
    %c0_16 = arith.constant 0 : index
    %25 = vector.load %arg5[%c0_14, %c0_15, %c0_16] : memref<3x1x32xf32, #tpu.memory_space<vmem>>, vector<1x1x32xf32>
    %26 = vector.shape_cast %25 : vector<1x1x32xf32> to vector<1x32xf32>
    %27 = vector.broadcast %26 : vector<1x32xf32> to vector<16x32xf32>
    %28 = arith.addf %24, %27 : vector<16x32xf32>
    %cst_17 = arith.constant 0.000000e+00 : f32
    %29 = vector.broadcast %cst_17 : f32 to vector<16x32xf32>
    %30 = arith.maximumf %28, %29 : vector<16x32xf32>
    %31 = arith.addf %30, %7 : vector<16x32xf32>
    %32 = arith.truncf %31 : vector<16x32xf32> to vector<16x32xbf16>
    %cst_18 = arith.constant 0.000000e+00 : bf16
    %33 = vector.broadcast %cst_18 : bf16 to vector<2x32xbf16>
    %34 = vector.extract_strided_slice %32 {offsets = [0, 0], sizes = [14, 32], strides = [1, 1]} : vector<16x32xbf16> to vector<14x32xbf16>
    %35 = tpu.concatenate %33, %34 in 0 : vector<2x32xbf16>, vector<14x32xbf16> -> vector<16x32xbf16>
    %cst_19 = arith.constant 0.000000e+00 : bf16
    %36 = vector.broadcast %cst_19 : bf16 to vector<2x32xbf16>
    %37 = vector.extract_strided_slice %32 {offsets = [2, 0], sizes = [14, 32], strides = [1, 1]} : vector<16x32xbf16> to vector<14x32xbf16>
    %38 = tpu.concatenate %37, %36 in 0 : vector<14x32xbf16>, vector<2x32xbf16> -> vector<16x32xbf16>
    %cst_20 = arith.constant 0.000000e+00 : bf16
    %39 = vector.broadcast %cst_20 : bf16 to vector<2x32xbf16>
    %40 = vector.extract_strided_slice %32 {offsets = [0, 0], sizes = [14, 32], strides = [1, 1]} : vector<16x32xbf16> to vector<14x32xbf16>
    %41 = tpu.concatenate %39, %40 in 0 : vector<2x32xbf16>, vector<14x32xbf16> -> vector<16x32xbf16>
    %cst_21 = arith.constant 0.000000e+00 : bf16
    %42 = vector.broadcast %cst_21 : bf16 to vector<2x32xbf16>
    %43 = vector.extract_strided_slice %32 {offsets = [2, 0], sizes = [14, 32], strides = [1, 1]} : vector<16x32xbf16> to vector<14x32xbf16>
    %44 = tpu.concatenate %43, %42 in 0 : vector<14x32xbf16>, vector<2x32xbf16> -> vector<16x32xbf16>
    %45 = tpu.concatenate %35, %32, %38, %41, %44 in 1 : vector<16x32xbf16>, vector<16x32xbf16>, vector<16x32xbf16>, vector<16x32xbf16>, vector<16x32xbf16> -> vector<16x160xbf16>
    %c1 = arith.constant 1 : index
    %c0_22 = arith.constant 0 : index
    %c0_23 = arith.constant 0 : index
    %46 = vector.load %arg4[%c1, %c0_22, %c0_23] : memref<3x160x32xbf16, #tpu.memory_space<vmem>>, vector<1x160x32xbf16>
    %47 = vector.shape_cast %46 : vector<1x160x32xbf16> to vector<160x32xbf16>
    %cst_24 = arith.constant dense<0.000000e+00> : vector<16x32xf32>
    %48 = tpu.matmul %45, %47, %cst_24 {dimension_numbers = #tpu.dot_dimension_numbers<[1], [0], [0], [1], [0, 0, 1, 1], [], []>} : vector<16x160xbf16>, vector<160x32xbf16>, vector<16x32xf32> -> vector<16x32xf32>
    %c1_25 = arith.constant 1 : index
    %c0_26 = arith.constant 0 : index
    %c0_27 = arith.constant 0 : index
    %49 = vector.load %arg5[%c1_25, %c0_26, %c0_27] : memref<3x1x32xf32, #tpu.memory_space<vmem>>, vector<1x1x32xf32>
    %50 = vector.shape_cast %49 : vector<1x1x32xf32> to vector<1x32xf32>
    %51 = vector.broadcast %50 : vector<1x32xf32> to vector<16x32xf32>
    %52 = arith.addf %48, %51 : vector<16x32xf32>
    %cst_28 = arith.constant 0.000000e+00 : f32
    %53 = vector.broadcast %cst_28 : f32 to vector<16x32xf32>
    %54 = arith.maximumf %52, %53 : vector<16x32xf32>
    %55 = arith.addf %54, %31 : vector<16x32xf32>
    %56 = arith.truncf %55 : vector<16x32xf32> to vector<16x32xbf16>
    %cst_29 = arith.constant 0.000000e+00 : bf16
    %57 = vector.broadcast %cst_29 : bf16 to vector<1x32xbf16>
    %58 = vector.extract_strided_slice %56 {offsets = [0, 0], sizes = [15, 32], strides = [1, 1]} : vector<16x32xbf16> to vector<15x32xbf16>
    %59 = tpu.concatenate %57, %58 in 0 : vector<1x32xbf16>, vector<15x32xbf16> -> vector<16x32xbf16>
    %cst_30 = arith.constant 0.000000e+00 : bf16
    %60 = vector.broadcast %cst_30 : bf16 to vector<1x32xbf16>
    %61 = vector.extract_strided_slice %56 {offsets = [1, 0], sizes = [15, 32], strides = [1, 1]} : vector<16x32xbf16> to vector<15x32xbf16>
    %62 = tpu.concatenate %61, %60 in 0 : vector<15x32xbf16>, vector<1x32xbf16> -> vector<16x32xbf16>
    %cst_31 = arith.constant 0.000000e+00 : bf16
    %63 = vector.broadcast %cst_31 : bf16 to vector<4x32xbf16>
    %64 = vector.extract_strided_slice %56 {offsets = [0, 0], sizes = [12, 32], strides = [1, 1]} : vector<16x32xbf16> to vector<12x32xbf16>
    %65 = tpu.concatenate %63, %64 in 0 : vector<4x32xbf16>, vector<12x32xbf16> -> vector<16x32xbf16>
    %cst_32 = arith.constant 0.000000e+00 : bf16
    %66 = vector.broadcast %cst_32 : bf16 to vector<4x32xbf16>
    %67 = vector.extract_strided_slice %56 {offsets = [4, 0], sizes = [12, 32], strides = [1, 1]} : vector<16x32xbf16> to vector<12x32xbf16>
    %68 = tpu.concatenate %67, %66 in 0 : vector<12x32xbf16>, vector<4x32xbf16> -> vector<16x32xbf16>
    %69 = tpu.concatenate %59, %56, %62, %65, %68 in 1 : vector<16x32xbf16>, vector<16x32xbf16>, vector<16x32xbf16>, vector<16x32xbf16>, vector<16x32xbf16> -> vector<16x160xbf16>
    %c2 = arith.constant 2 : index
    %c0_33 = arith.constant 0 : index
    %c0_34 = arith.constant 0 : index
    %70 = vector.load %arg4[%c2, %c0_33, %c0_34] : memref<3x160x32xbf16, #tpu.memory_space<vmem>>, vector<1x160x32xbf16>
    %71 = vector.shape_cast %70 : vector<1x160x32xbf16> to vector<160x32xbf16>
    %cst_35 = arith.constant dense<0.000000e+00> : vector<16x32xf32>
    %72 = tpu.matmul %69, %71, %cst_35 {dimension_numbers = #tpu.dot_dimension_numbers<[1], [0], [0], [1], [0, 0, 1, 1], [], []>} : vector<16x160xbf16>, vector<160x32xbf16>, vector<16x32xf32> -> vector<16x32xf32>
    %c2_36 = arith.constant 2 : index
    %c0_37 = arith.constant 0 : index
    %c0_38 = arith.constant 0 : index
    %73 = vector.load %arg5[%c2_36, %c0_37, %c0_38] : memref<3x1x32xf32, #tpu.memory_space<vmem>>, vector<1x1x32xf32>
    %74 = vector.shape_cast %73 : vector<1x1x32xf32> to vector<1x32xf32>
    %75 = vector.broadcast %74 : vector<1x32xf32> to vector<16x32xf32>
    %76 = arith.addf %72, %75 : vector<16x32xf32>
    %cst_39 = arith.constant 0.000000e+00 : f32
    %77 = vector.broadcast %cst_39 : f32 to vector<16x32xf32>
    %78 = arith.maximumf %76, %77 : vector<16x32xf32>
    %79 = arith.addf %78, %55 : vector<16x32xf32>
    %80 = arith.truncf %79 : vector<16x32xf32> to vector<16x32xbf16>
    %c0_40 = arith.constant 0 : index
    %c0_41 = arith.constant 0 : index
    %81 = vector.load %arg6[%c0_40, %c0_41] : memref<32x128xbf16, #tpu.memory_space<vmem>>, vector<32x128xbf16>
    %cst_42 = arith.constant dense<0.000000e+00> : vector<16x128xf32>
    %82 = tpu.matmul %80, %81, %cst_42 {dimension_numbers = #tpu.dot_dimension_numbers<[1], [0], [0], [1], [0, 0, 1, 1], [], []>} : vector<16x32xbf16>, vector<32x128xbf16>, vector<16x128xf32> -> vector<16x128xf32>
    %c0_43 = arith.constant 0 : index
    %c0_44 = arith.constant 0 : index
    %83 = vector.load %arg7[%c0_43, %c0_44] : memref<1x128xf32, #tpu.memory_space<vmem>>, vector<1x128xf32>
    %84 = vector.broadcast %83 : vector<1x128xf32> to vector<16x128xf32>
    %85 = arith.addf %82, %84 : vector<16x128xf32>
    %c0_45 = arith.constant 0 : index
    %c0_46 = arith.constant 0 : index
    %c0_47 = arith.constant 0 : index
    %86 = vector.load %arg8[%c0_45, %c0_46, %c0_47] : memref<1x16x128xf32, #tpu.memory_space<vmem>>, vector<1x16x128xf32>
    %87 = vector.shape_cast %86 : vector<1x16x128xf32> to vector<16x128xf32>
    %88 = vector.shape_cast %85 : vector<16x128xf32> to vector<1x16x128xf32>
    tpu.vector_store %arg8[%c0_45, %c0_46, %c0_47], %88 {strides = array<i32>} : memref<1x16x128xf32, #tpu.memory_space<vmem>>, vector<1x16x128xf32>,
    return
  }
  func.func @transform_0(%arg0: i32) -> (i32, i32, i32) {
    %c0_i32 = arith.constant 0 : i32
    %c0_i32_0 = arith.constant 0 : i32
    %c0_i32_1 = arith.constant 0 : i32
    return %arg0, %c0_i32, %c0_i32_0 : i32, i32, i32
  }
  func.func @transform_1(%arg0: i32) -> (i32, i32) {
    %c0_i32 = arith.constant 0 : i32
    %c0_i32_0 = arith.constant 0 : i32
    %c0_i32_1 = arith.constant 0 : i32
    return %c0_i32, %c0_i32_0 : i32, i32
  }
  func.func @transform_2(%arg0: i32) -> (i32, i32) {
    %c0_i32 = arith.constant 0 : i32
    %c0_i32_0 = arith.constant 0 : i32
    %c0_i32_1 = arith.constant 0 : i32
    return %c0_i32, %c0_i32_0 : i32, i32
  }
  func.func @transform_3(%arg0: i32) -> (i32, i32, i32) {
    %c0_i32 = arith.constant 0 : i32
    %c0_i32_0 = arith.constant 0 : i32
    %c0_i32_1 = arith.constant 0 : i32
    %c0_i32_2 = arith.constant 0 : i32
    return %c0_i32, %c0_i32_0, %c0_i32_1 : i32, i32, i32
  }
  func.func @transform_4(%arg0: i32) -> (i32, i32, i32) {
    %c0_i32 = arith.constant 0 : i32
    %c0_i32_0 = arith.constant 0 : i32
    %c0_i32_1 = arith.constant 0 : i32
    %c0_i32_2 = arith.constant 0 : i32
    return %c0_i32, %c0_i32_0, %c0_i32_1 : i32, i32, i32
  }
  func.func @transform_5(%arg0: i32) -> (i32, i32) {
    %c0_i32 = arith.constant 0 : i32
    %c0_i32_0 = arith.constant 0 : i32
    %c0_i32_1 = arith.constant 0 : i32
    return %c0_i32, %c0_i32_0 : i32, i32
  }
  func.func @transform_6(%arg0: i32) -> (i32, i32) {
    %c0_i32 = arith.constant 0 : i32
    %c0_i32_0 = arith.constant 0 : i32
    %c0_i32_1 = arith.constant 0 : i32
    return %c0_i32, %c0_i32_0 : i32, i32
  }
  func.func @transform_7(%arg0: i32) -> (i32, i32, i32) {
    %c0_i32 = arith.constant 0 : i32
    %c0_i32_0 = arith.constant 0 : i32
    %c0_i32_1 = arith.constant 0 : i32
    return %arg0, %c0_i32, %c0_i32_0 : i32, i32, i32
  }
}

</mosaic_0001>

<llo_original>
// kernel: tpu_custom_call.1
$region0: #{tpu_custom_call.1}
  #allocation0 [shape = 'u32[]', space=smem, size = 0x4, offset = 0x4, fixed_abs, tag = 'smem constant byte address 0x4 - core index']
  #allocation1 [shape = 'u32[144,128]{1,0:T(1,128)}', space=vmem, size = 0x12000, scoped, tag = 'internal scratch']
  %s0 = inlined_call_operand.vmem [shape: f32[2,16,8], index: 0, kind: input, shape index: {}]
  %s1 = inlined_call_operand.vmem [shape: bf16[8,32], index: 1, kind: input, shape index: {}]
  %s2 = inlined_call_operand.vmem [shape: f32[1,32], index: 2, kind: input, shape index: {}]
  %s3 = inlined_call_operand.vmem [shape: bf16[3,160,32], index: 3, kind: input, shape index: {}]
  %s4 = inlined_call_operand.vmem [shape: f32[3,1,32], index: 4, kind: input, shape index: {}]
  %s5 = inlined_call_operand.vmem [shape: bf16[32,128], index: 5, kind: input, shape index: {}]
  %s6 = inlined_call_operand.vmem [shape: f32[1,128], index: 6, kind: input, shape index: {}]
  %s7 = inlined_call_operand.hbm [shape: f32[2,16,128], index: 7, kind: output, shape index: {}]
  %s8 = sld [smem:[#allocation0]]
  $region61: #{tpu_custom_call.1} parent=0
    _
  %s10 = ssub.s32 1, %s8
  %s11 = scalar_select 0, %s10, %s8
  $region1: #{tpu_custom_call.1} parent=0
    #allocation2 [shape = 'u8[16384]{0}', space=vmem, size = 0x4000, scoped, tag = 'output window, operand 0']
    #allocation3 [shape = 's32[2]{0}', space=sflag, size = 0x8, scoped, tag = 'scoped memory for tpu_custom_call.1']
    %12 = vsyncpa [#allocation3], 0
    %s13 = scalar_lea.sflag [#allocation3], 1
    %14 = vsyncpa %s13, 0
    loop: start=0, step=1, limit=4
    $region2: #{tpu_custom_call.1} parent=1 // loop_pre_header
      _
    $region3: #{tpu_custom_call.1} parent=1 // loop_header
      %s16 = sphi 0, %s20
      %p17 = scmp.ge.s32.totalorder %s16, 4
      %s26 = sphi 0, %s28
      %s29 = sphi 0, %s26
      %s30 = sphi 0, %s29
      %s46 = sphi 0, %s30
      %s50 = sphi 0, %s50
      %s52 = sphi 0, %s50
      %s53 = sphi 0, %s52
      %s67 = sphi 0, %s53
      %s71 = sphi 0, %s71
      %s73 = sphi 0, %s71
      %s74 = sphi 0, %s73
      %s88 = sphi 0, %s74
      %s92 = sphi 0, %s92
      %s94 = sphi 0, %s92
      %s95 = sphi 0, %s94
      %s109 = sphi 0, %s95
      %s113 = sphi 0, %s113
      %s115 = sphi 0, %s113
      %s116 = sphi 0, %s115
      %s130 = sphi 0, %s116
      %s134 = sphi 0, %s134
      %s136 = sphi 0, %s134
      %s137 = sphi 0, %s136
      %s151 = sphi 0, %s137
      %s155 = sphi 0, %s155
      %s157 = sphi 0, %s155
      %s158 = sphi 0, %s157
      %s172 = sphi 0, %s158
      %s178 = sphi 0, %s180
      %s181 = sphi 0, %s178
      %s182 = sphi 0, %s181
      %s198 = sphi 0, %s182
    $region4: #{tpu_custom_call.1} parent=1 // loop_header_branch
      %19 = sbr.rel (%p17) target = $region8
    $region5: #{tpu_custom_call.1} parent=1 // loop_body
      %s21 = ssub.s32 %s16, 1
      %s22 = ssub.s32 %s16, 2
      %s23 = sadd.s32 %s16, 1
      %s24 = ssub.s32 %s16, %s23
      %p25 = scmp.eq.s32.totalorder %s24, 0
      %s27 = sadd.s32 %s26, 1
      %s28 = scalar_select %p25, %s26, %s27
      %p31 = pneg %p25
      %p32 = scmp.eq.s32.totalorder %s16, 1
      %p33 = por %p31, %p32
      %p34 = scmp.ne.s32.totalorder %s26, %s29
      %p35 = scmp.eq.s32.totalorder %s16, 0
      %p36 = por %p34, %p35
      %p37 = scmp.ne.s32.totalorder %s26, %s29
      %p38 = scmp.eq.s32.totalorder %s21, 1
      %p39 = por %p37, %p38
      %p40 = scmp.ne.s32.totalorder %s29, %s30
      %p41 = scmp.eq.s32.totalorder %s21, 0
      %p42 = por %p40, %p41
      %p43 = scmp.ne.s32.totalorder %s29, %s30
      %p44 = scmp.eq.s32.totalorder %s22, 1
      %p45 = por %p43, %p44
      %p47 = scmp.ne.s32.totalorder %s30, %s46
      %p48 = scmp.eq.s32.totalorder %s22, 0
      %p49 = por %p47, %p48
      %s51 = sadd.s32 %s50, 1
      %p54 = scmp.eq.s32.totalorder %s16, 1
      %p55 = scmp.ne.s32.totalorder %s50, %s52
      %p56 = scmp.eq.s32.totalorder %s16, 0
      %p57 = por %p55, %p56
      %p58 = scmp.ne.s32.totalorder %s50, %s52
      %p59 = scmp.eq.s32.totalorder %s21, 1
      %p60 = por %p58, %p59
      %p61 = scmp.ne.s32.totalorder %s52, %s53
      %p62 = scmp.eq.s32.totalorder %s21, 0
      %p63 = por %p61, %p62
      %p64 = scmp.ne.s32.totalorder %s52, %s53
      %p65 = scmp.eq.s32.totalorder %s22, 1
      %p66 = por %p64, %p65
      %p68 = scmp.ne.s32.totalorder %s53, %s67
      %p69 = scmp.eq.s32.totalorder %s22, 0
      %p70 = por %p68, %p69
      %s72 = sadd.s32 %s71, 1
      %p75 = scmp.eq.s32.totalorder %s16, 1
      %p76 = scmp.ne.s32.totalorder %s71, %s73
      %p77 = scmp.eq.s32.totalorder %s16, 0
      %p78 = por %p76, %p77
      %p79 = scmp.ne.s32.totalorder %s71, %s73
      %p80 = scmp.eq.s32.totalorder %s21, 1
      %p81 = por %p79, %p80
      %p82 = scmp.ne.s32.totalorder %s73, %s74
      %p83 = scmp.eq.s32.totalorder %s21, 0
      %p84 = por %p82, %p83
      %p85 = scmp.ne.s32.totalorder %s73, %s74
      %p86 = scmp.eq.s32.totalorder %s22, 1
      %p87 = por %p85, %p86
      %p89 = scmp.ne.s32.totalorder %s74, %s88
      %p90 = scmp.eq.s32.totalorder %s22, 0
      %p91 = por %p89, %p90
      %s93 = sadd.s32 %s92, 1
      %p96 = scmp.eq.s32.totalorder %s16, 1
      %p97 = scmp.ne.s32.totalorder %s92, %s94
      %p98 = scmp.eq.s32.totalorder %s16, 0
      %p99 = por %p97, %p98
      %p100 = scmp.ne.s32.totalorder %s92, %s94
      %p101 = scmp.eq.s32.totalorder %s21, 1
      %p102 = por %p100, %p101
      %p103 = scmp.ne.s32.totalorder %s94, %s95
      %p104 = scmp.eq.s32.totalorder %s21, 0
      %p105 = por %p103, %p104
      %p106 = scmp.ne.s32.totalorder %s94, %s95
      %p107 = scmp.eq.s32.totalorder %s22, 1
      %p108 = por %p106, %p107
      %p110 = scmp.ne.s32.totalorder %s95, %s109
      %p111 = scmp.eq.s32.totalorder %s22, 0
      %p112 = por %p110, %p111
      %s114 = sadd.s32 %s113, 1
      %p117 = scmp.eq.s32.totalorder %s16, 1
      %p118 = scmp.ne.s32.totalorder %s113, %s115
      %p119 = scmp.eq.s32.totalorder %s16, 0
      %p120 = por %p118, %p119
      %p121 = scmp.ne.s32.totalorder %s113, %s115
      %p122 = scmp.eq.s32.totalorder %s21, 1
      %p123 = por %p121, %p122
      %p124 = scmp.ne.s32.totalorder %s115, %s116
      %p125 = scmp.eq.s32.totalorder %s21, 0
      %p126 = por %p124, %p125
      %p127 = scmp.ne.s32.totalorder %s115, %s116
      %p128 = scmp.eq.s32.totalorder %s22, 1
      %p129 = por %p127, %p128
      %p131 = scmp.ne.s32.totalorder %s116, %s130
      %p132 = scmp.eq.s32.totalorder %s22, 0
      %p133 = por %p131, %p132
      %s135 = sadd.s32 %s134, 1
      %p138 = scmp.eq.s32.totalorder %s16, 1
      %p139 = scmp.ne.s32.totalorder %s134, %s136
      %p140 = scmp.eq.s32.totalorder %s16, 0
      %p141 = por %p139, %p140
      %p142 = scmp.ne.s32.totalorder %s134, %s136
      %p143 = scmp.eq.s32.totalorder %s21, 1
      %p144 = por %p142, %p143
      %p145 = scmp.ne.s32.totalorder %s136, %s137
      %p146 = scmp.eq.s32.totalorder %s21, 0
      %p147 = por %p145, %p146
      %p148 = scmp.ne.s32.totalorder %s136, %s137
      %p149 = scmp.eq.s32.totalorder %s22, 1
      %p150 = por %p148, %p149
      %p152 = scmp.ne.s32.totalorder %s137, %s151
      %p153 = scmp.eq.s32.totalorder %s22, 0
      %p154 = por %p152, %p153
      %s156 = sadd.s32 %s155, 1
      %p159 = scmp.eq.s32.totalorder %s16, 1
      %p160 = scmp.ne.s32.totalorder %s155, %s157
      %p161 = scmp.eq.s32.totalorder %s16, 0
      %p162 = por %p160, %p161
      %p163 = scmp.ne.s32.totalorder %s155, %s157
      %p164 = scmp.eq.s32.totalorder %s21, 1
      %p165 = por %p163, %p164
      %p166 = scmp.ne.s32.totalorder %s157, %s158
      %p167 = scmp.eq.s32.totalorder %s21, 0
      %p168 = por %p166, %p167
      %p169 = scmp.ne.s32.totalorder %s157, %s158
      %p170 = scmp.eq.s32.totalorder %s22, 1
      %p171 = por %p169, %p170
      %p173 = scmp.ne.s32.totalorder %s158, %s172
      %p174 = scmp.eq.s32.totalorder %s22, 0
      %p175 = por %p173, %p174
      %s176 = ssub.s32 %s16, %s23
      %p177 = scmp.eq.s32.totalorder %s176, 0
      %s179 = sadd.s32 %s178, 1
      %s180 = scalar_select %p177, %s178, %s179
      %p183 = pneg %p177
      %p184 = scmp.eq.s32.totalorder %s16, 1
      %p185 = por %p183, %p184
      %p186 = scmp.ne.s32.totalorder %s178, %s181
      %p187 = scmp.eq.s32.totalorder %s16, 0
      %p188 = por %p186, %p187
      %p189 = scmp.ne.s32.totalorder %s178, %s181
      %p190 = scmp.eq.s32.totalorder %s21, 1
      %p191 = por %p189, %p190
      %p192 = scmp.ne.s32.totalorder %s181, %s182
      %p193 = scmp.eq.s32.totalorder %s21, 0
      %p194 = por %p192, %p193
      %p195 = scmp.ne.s32.totalorder %s181, %s182
      %p196 = scmp.eq.s32.totalorder %s22, 1
      %p197 = por %p195, %p196
      %p199 = scmp.ne.s32.totalorder %s182, %s198
      %p200 = scmp.eq.s32.totalorder %s22, 0
      %p201 = por %p199, %p200
      %p202 = scmp.le.s32.totalorder 1, %s16
      %p203 = scmp.lt.s32.totalorder %s16, 3
      %p204 = pnand %p202, %p203
      %p205 = pneg %p204
      // Predicated region
      $region9: #{tpu_custom_call.1} parent=5 // pred_check
        _
      $region10: #{tpu_custom_call.1} parent=5 // pred_check_branch
        %207 = sbr.rel (%p204) target = $region12
      $region11: #{tpu_custom_call.1} parent=5 // pred_region
        %s208 = ssub.s32 %s16, 1
        // Predicated region
        $region13: #{tpu_custom_call.1} parent=11 // pred_check
          %p209 = pneg %p63
        $region14: #{tpu_custom_call.1} parent=11 // pred_check_branch
          %211 = sbr.rel (%p209) target = $region16
        $region15: #{tpu_custom_call.1} parent=11 // pred_region
          _
        $region16: #{tpu_custom_call.1} parent=11 // pred_fallthru
          _
        // Predicated region
        $region17: #{tpu_custom_call.1} parent=11 // pred_check
          %p212 = pneg %p84
        $region18: #{tpu_custom_call.1} parent=11 // pred_check_branch
          %214 = sbr.rel (%p212) target = $region20
        $region19: #{tpu_custom_call.1} parent=11 // pred_region
          _
        $region20: #{tpu_custom_call.1} parent=11 // pred_fallthru
          _
        // Predicated region
        $region21: #{tpu_custom_call.1} parent=11 // pred_check
          %p215 = pneg %p105
        $region22: #{tpu_custom_call.1} parent=11 // pred_check_branch
          %217 = sbr.rel (%p215) target = $region24
        $region23: #{tpu_custom_call.1} parent=11 // pred_region
          _
        $region24: #{tpu_custom_call.1} parent=11 // pred_fallthru
          _
        // Predicated region
        $region25: #{tpu_custom_call.1} parent=11 // pred_check
          %p218 = pneg %p126
        $region26: #{tpu_custom_call.1} parent=11 // pred_check_branch
          %220 = sbr.rel (%p218) target = $region28
        $region27: #{tpu_custom_call.1} parent=11 // pred_region
          _
        $region28: #{tpu_custom_call.1} parent=11 // pred_fallthru
          _
        // Predicated region
        $region29: #{tpu_custom_call.1} parent=11 // pred_check
          %p221 = pneg %p147
        $region30: #{tpu_custom_call.1} parent=11 // pred_check_branch
          %223 = sbr.rel (%p221) target = $region32
        $region31: #{tpu_custom_call.1} parent=11 // pred_region
          _
        $region32: #{tpu_custom_call.1} parent=11 // pred_fallthru
          _
        // Predicated region
        $region33: #{tpu_custom_call.1} parent=11 // pred_check
          %p224 = pneg %p168
        $region34: #{tpu_custom_call.1} parent=11 // pred_check_branch
          %226 = sbr.rel (%p224) target = $region36
        $region35: #{tpu_custom_call.1} parent=11 // pred_region
          _
        $region36: #{tpu_custom_call.1} parent=11 // pred_fallthru
          _
      $region12: #{tpu_custom_call.1} parent=5 // pred_fallthru
        _
      %p227 = scmp.lt.s32.totalorder %s16, 2
      // Predicated region
      $region37: #{tpu_custom_call.1} parent=5 // pred_check
        %p228 = pneg %p227
      $region38: #{tpu_custom_call.1} parent=5 // pred_check_branch
        %230 = sbr.rel (%p228) target = $region40
      $region39: #{tpu_custom_call.1} parent=5 // pred_region
        // Predicated region
        $region41: #{tpu_custom_call.1} parent=39 // pred_check
          %p231 = pneg %p36
        $region42: #{tpu_custom_call.1} parent=39 // pred_check_branch
          %233 = sbr.rel (%p231) target = $region44
        $region43: #{tpu_custom_call.1} parent=39 // pred_region
          %p234 = scmp.lt.s32.totalorder %s16, 1
          %s235 = scalar_select %p234, %s16, 1
          %s236 = smul.addr %s235, 2
          %s237 = smul.addr %s236, 8
          %s238 = scalar_lea.vmem %s0, %s237
        $region44: #{tpu_custom_call.1} parent=39 // pred_fallthru
          _
      $region40: #{tpu_custom_call.1} parent=5 // pred_fallthru
        _
      %p239 = scmp.le.s32.totalorder 1, %s16
      %p240 = scmp.lt.s32.totalorder %s16, 3
      %p241 = pnand %p239, %p240
      %p242 = pneg %p241
      // Predicated region
      $region45: #{tpu_custom_call.1} parent=5 // pred_check
        _
      $region46: #{tpu_custom_call.1} parent=5 // pred_check_branch
        %244 = sbr.rel (%p241) target = $region48
      $region47: #{tpu_custom_call.1} parent=5 // pred_region
        %s245 = ssub.s32 %s16, 1
        %p246 = scmp.lt.s32.totalorder %s21, 1
        %s247 = scalar_select %p246, %s21, 1
        %s248 = smul.addr %s247, 2
        %s249 = smul.addr %s248, 8
        %s250 = scalar_lea.vmem %s0, %s249
        %p251 = pneg %p42
        %p252 = pneg %p39
        %p253 = pneg %p63
        %p254 = pneg %p60
        %p255 = pneg %p84
        %p256 = pneg %p81
        %p257 = pneg %p105
        %p258 = pneg %p102
        %p259 = pneg %p126
        %p260 = pneg %p123
        %p261 = pneg %p147
        %p262 = pneg %p144
        %p263 = pneg %p168
        %p264 = pneg %p165
        %p265 = pneg %p194
        %p266 = pneg %p191
        %s267 = sand.u32 %s181, 1
        %s268 = scalar_lea.sflag [#allocation3], %s267
        %s269 = sand.u32 %s181, 1
        %s270 = smul.addr %s269, 16
        %s271 = scalar_lea.vmem [#allocation2], %s270
        %p272 = scmp.lt.s32.totalorder %s21, 1
        %s273 = scalar_select %p272, %s21, 1
        %s274 = smul.addr %s273, 2
        %s275 = smul.addr %s274, 8
        %s276 = scalar_lea.vmem %s0, %s275
        %v278 = vld [vmem:[%s276] sm:$0xff]
        %v279 = vld [vmem:[%s276 + $0x8] sm:$0xff]
        %v280 = vpack.c.bf16 %v279, %v278
        %v281 = vld [vmem:[%s1] sm:$0xf]
        %v282 = vld [vmem:[%s2] sm:$0x1]
        %v284 = vlaneseq
        %v285 = vshrl.u32 %v284, 7
        %v286 = vsub.s32 0, %v285
        %v287 = vrot.slane %v282, %v286
        %vm289 = vcmask 64512
        %v291 = vsel %vm289, %v280, 0
        %vm293 = vcmask 1043456
        %v295 = vsel %vm293, %v281, 0
        %297 = vmatprep.subr.bf16.mxu0 0
        %298 = vmatpush1.bf16.msra.mxu0 %v295
        %299 = vmatprep.subr.bf16.mxu0 0
        %300 = vmatpush1.bf16.msra.mxu0 0
        %301 = vmatprep.subr.bf16.mxu0 0
        %302 = vmatpush1.bf16.msra.mxu0 0
        %303 = vmatprep.subr.bf16.mxu0 0
        %304 = vmatpush1.bf16.msra.mxu0 0
        %305 = vmatprep.subr.bf16.mxu0 0
        %306 = vmatpush1.bf16.msra.mxu0 0
        %307 = vmatprep.subr.bf16.mxu0 0
        %308 = vmatpush1.bf16.msra.mxu0 0
        %309 = vmatprep.subr.bf16.mxu0 0
        %310 = vmatpush1.bf16.msra.mxu0 0
        %311 = vmatprep.subr.bf16.mxu0 0
        %312 = vmatpush1.bf16.msra.mxu0 0
        %313 = vmatprep.subr.bf16.mxu0 0
        %314 = vmatpush1.bf16.msra.mxu0 0
        %315 = vmatprep.subr.bf16.mxu0 0
        %316 = vmatpush1.bf16.msra.mxu0 0
        %317 = vmatprep.subr.bf16.mxu0 0
        %318 = vmatpush1.bf16.msra.mxu0 0
        %319 = vmatprep.subr.bf16.mxu0 0
        %320 = vmatpush1.bf16.msra.mxu0 0
        %321 = vmatprep.subr.bf16.mxu0 0
        %322 = vmatpush1.bf16.msra.mxu0 0
        %323 = vmatprep.subr.bf16.mxu0 0
        %324 = vmatpush1.bf16.msra.mxu0 0
        %325 = vmatprep.subr.bf16.mxu0 0
        %326 = vmatpush1.bf16.msra.mxu0 0
        %327 = vmatprep.subr.bf16.mxu0 0
        %328 = vmatpush1.bf16.msra.mxu0 0
        %329 = vmatprep.mubr.bf16.mxu0 0
        %330 = vmatmul.mubr.bf16.gmra.mrb[0].mxu0 %v291
        %v331 = vpop.f32.mrb[0].mxu0
        %v332 = vadd.f32 %v287, %v331
        %v333 = vpop.f32.mrb[0].mxu0
        %v334 = vpop.f32.mrb[0].mxu0
        %v335 = vadd.f32 %v287, %v334
        %v336 = vpop.f32.mrb[0].mxu0
        %337 = vdwg.mxu0
        %v338 = vpack.c.bf16 %v335, %v332
        %v340 = vrot.slane %v338, 6
        %vm341 = vcmask 1041408
        %v344 = vsel %vm341, 0, %v340
        %v345 = vrot.slane %v338, 2
        %vm346 = vcmask 1045504
        %v348 = vsel %vm346, %v345, 0
        %v350 = vshrl.u32 %v338, 16
        %v352 = vrot.slane %v350, 7
        %v353 = vshll.u32 %v338, 16
        %v355 = vor.u32 %v352, %v353
        %vm357 = vcmask 1040384
        %vm358 = vsmask.f32 256
        %vm359 = vmand %vm357, %vm358
        %v360 = vsel %vm359, 0, %v355
        %v361 = vrot.slane %v353, 1
        %v362 = vor.u32 %v350, %v361
        %vm364 = vcmask 1047552
        %vm365 = vsmask.f32 7424
        %vm366 = vmand %vm364, %vm365
        %v367 = vsel %vm366, %v362, 0
        %368 = vrot.lane.b32.xlu0 %v338, 32
        %v369 = vpop.permute.xlu0 %368
        %371 = vrot.lane.b32.xlu0 %v348, 64
        %v372 = vpop.permute.xlu0 %371
        %374 = vrot.lane.b32.xlu0 %v360, 96
        %v375 = vpop.permute.xlu0 %374
        %vm376 = vcmask 261120
        %v378 = vsel %vm376, %v344, %v369
        %vm379 = vcmask 523264
        %v381 = vsel %vm379, %v378, %v372
        %vm382 = vcmask 785408
        %v384 = vsel %vm382, %v381, %v375
        %v386 = vld [vmem:[%s3] sm:$0xf]
        %v387 = vld [vmem:[%s3 + $0x4] sm:$0xf]
        %v388 = vld [vmem:[%s3 + $0x8] sm:$0xf]
        %v389 = vld [vmem:[%s3 + $0xc] sm:$0xf]
        %v390 = vld [vmem:[%s3 + $0x10] sm:$0xf]
        %v391 = vld [vmem:[%s3 + $0x14] sm:$0xf]
        %v392 = vld [vmem:[%s3 + $0x18] sm:$0xf]
        %v393 = vld [vmem:[%s3 + $0x1c] sm:$0xf]
        %v394 = vld [vmem:[%s3 + $0x20] sm:$0xf]
        %v395 = vld [vmem:[%s3 + $0x24] sm:$0xf]
        %v396 = vld [vmem:[%s3 + $0x28] sm:$0xf]
        %v397 = vld [vmem:[%s3 + $0x2c] sm:$0xf]
        %v398 = vld [vmem:[%s3 + $0x30] sm:$0xf]
        %v399 = vld [vmem:[%s3 + $0x34] sm:$0xf]
        %v400 = vld [vmem:[%s3 + $0x38] sm:$0xf]
        %v401 = vld [vmem:[%s3 + $0x3c] sm:$0xf]
        %v402 = vld [vmem:[%s3 + $0x40] sm:$0xf]
        %v403 = vld [vmem:[%s3 + $0x44] sm:$0xf]
        %v404 = vld [vmem:[%s3 + $0x48] sm:$0xf]
        %v405 = vld [vmem:[%s3 + $0x4c] sm:$0xf]
        %v406 = vld [vmem:[%s4] sm:$0x1]
        %v408 = vlaneseq
        %v409 = vshrl.u32 %v408, 7
        %v410 = vsub.s32 0, %v409
        %v411 = vrot.slane %v406, %v410
        %v433 = vunpack.c.l.b16 %v386
        %v434 = vunpack.c.l.b16 %v387
        %v435 = vunpack.c.l.b16 %v388
        %v436 = vunpack.c.l.b16 %v389
        %v437 = vunpack.c.l.b16 %v390
        %v438 = vunpack.c.l.b16 %v391
        %v439 = vunpack.c.l.b16 %v392
        %v440 = vunpack.c.l.b16 %v393
        %v441 = vunpack.c.l.b16 %v394
        %v442 = vunpack.c.l.b16 %v395
        %v443 = vunpack.c.l.b16 %v396
        %v444 = vunpack.c.l.b16 %v397
        %v445 = vunpack.c.l.b16 %v398
        %v446 = vunpack.c.l.b16 %v399
        %v447 = vunpack.c.l.b16 %v400
        %v448 = vunpack.c.l.b16 %v401
        %v449 = vunpack.c.l.b16 %v402
        %v450 = vunpack.c.l.b16 %v403
        %v451 = vunpack.c.l.b16 %v404
        %v452 = vunpack.c.l.b16 %v405
        %v453 = vpack.c.b16 %v434, %v433
        %v454 = vpack.c.b16 %v436, %v435
        %v455 = vpack.c.b16 %v438, %v437
        %v456 = vpack.c.b16 %v440, %v439
        %v457 = vpack.c.b16 %v442, %v441
        %v458 = vpack.c.b16 %v444, %v443
        %v459 = vpack.c.b16 %v446, %v445
        %v460 = vpack.c.b16 %v448, %v447
        %v461 = vpack.c.b16 %v450, %v449
        %v462 = vpack.c.b16 %v452, %v451
        %v474 = vsel %vm376, %v367, 0
        %476 = vmatprep.subr.bf16.mxu0 0
        %477 = vmatpush1.bf16.msra.mxu0 %v453
        %478 = vmatprep.subr.bf16.mxu0 0
        %479 = vmatpush1.bf16.msra.mxu0 %v454
        %480 = vmatprep.subr.bf16.mxu0 0
        %481 = vmatpush1.bf16.msra.mxu0 %v455
        %482 = vmatprep.subr.bf16.mxu0 0
        %483 = vmatpush1.bf16.msra.mxu0 %v456
        %484 = vmatprep.subr.bf16.mxu0 0
        %485 = vmatpush1.bf16.msra.mxu0 %v457
        %486 = vmatprep.subr.bf16.mxu0 0
        %487 = vmatpush1.bf16.msra.mxu0 %v458
        %488 = vmatprep.subr.bf16.mxu0 0
        %489 = vmatpush1.bf16.msra.mxu0 %v459
        %490 = vmatprep.subr.bf16.mxu0 0
        %491 = vmatpush1.bf16.msra.mxu0 %v460
        %492 = vmatprep.subr.bf16.mxu0 0
        %493 = vmatpush1.bf16.msra.mxu0 %v461
        %494 = vmatprep.subr.bf16.mxu0 0
        %495 = vmatpush1.bf16.msra.mxu0 %v462
        %496 = vmatprep.subr.bf16.mxu0 0
        %497 = vmatpush1.bf16.msra.mxu0 0
        %498 = vmatprep.subr.bf16.mxu0 0
        %499 = vmatpush1.bf16.msra.mxu0 0
        %500 = vmatprep.subr.bf16.mxu0 0
        %501 = vmatpush1.bf16.msra.mxu0 0
        %502 = vmatprep.subr.bf16.mxu0 0
        %503 = vmatpush1.bf16.msra.mxu0 0
        %504 = vmatprep.subr.bf16.mxu0 0
        %505 = vmatpush1.bf16.msra.mxu0 0
        %506 = vmatprep.subr.bf16.mxu0 0
        %507 = vmatpush1.bf16.msra.mxu0 0
        %508 = vmatprep.mubr.bf16.mxu0 %v474
        %509 = vmatmul.mubr.bf16.gmra.mrb[0].mxu0 %v384
        %v510 = vpop.f32.mrb[0].mxu0
        %v511 = vadd.f32 %v411, %v510
        %v512 = vpop.f32.mrb[0].mxu0
        %v513 = vpop.f32.mrb[0].mxu0
        %v514 = vadd.f32 %v411, %v513
        %v515 = vpop.f32.mrb[0].mxu0
        %516 = vdwg.mxu0
        %v517 = vmax.f32 %v511, 0.0
        %v518 = vmax.f32 %v514, 0.0
        %v519 = vadd.f32 %v517, %v332
        %v520 = vadd.f32 %v518, %v335
        %v521 = vpack.c.bf16 %v520, %v519
        %v523 = vrot.slane %v521, 7
        %vm524 = vcmask 1040384
        %v526 = vsel %vm524, 0, %v523
        %v527 = vrot.slane %v521, 1
        %vm528 = vcmask 1046528
        %v530 = vsel %vm528, %v527, 0
        %531 = vrot.lane.b32.xlu0 %v521, 32
        %v532 = vpop.permute.xlu0 %531
        %534 = vrot.lane.b32.xlu0 %v530, 64
        %v535 = vpop.permute.xlu0 %534
        %537 = vrot.lane.b32.xlu0 %v526, 96
        %v538 = vpop.permute.xlu0 %537
        %v540 = vsel %vm376, %v526, %v532
        %v542 = vsel %vm379, %v540, %v535
        %v544 = vsel %vm382, %v542, %v538
        %s546 = scalar_lea.vmem %s3, 80
        %v547 = vld [vmem:[%s546] sm:$0xf]
        %v548 = vld [vmem:[%s546 + $0x4] sm:$0xf]
        %v549 = vld [vmem:[%s546 + $0x8] sm:$0xf]
        %v550 = vld [vmem:[%s546 + $0xc] sm:$0xf]
        %v551 = vld [vmem:[%s546 + $0x10] sm:$0xf]
        %v552 = vld [vmem:[%s546 + $0x14] sm:$0xf]
        %v553 = vld [vmem:[%s546 + $0x18] sm:$0xf]
        %v554 = vld [vmem:[%s546 + $0x1c] sm:$0xf]
        %v555 = vld [vmem:[%s546 + $0x20] sm:$0xf]
        %v556 = vld [vmem:[%s546 + $0x24] sm:$0xf]
        %v557 = vld [vmem:[%s546 + $0x28] sm:$0xf]
        %v558 = vld [vmem:[%s546 + $0x2c] sm:$0xf]
        %v559 = vld [vmem:[%s546 + $0x30] sm:$0xf]
        %v560 = vld [vmem:[%s546 + $0x34] sm:$0xf]
        %v561 = vld [vmem:[%s546 + $0x38] sm:$0xf]
        %v562 = vld [vmem:[%s546 + $0x3c] sm:$0xf]
        %v563 = vld [vmem:[%s546 + $0x40] sm:$0xf]
        %v564 = vld [vmem:[%s546 + $0x44] sm:$0xf]
        %v565 = vld [vmem:[%s546 + $0x48] sm:$0xf]
        %v566 = vld [vmem:[%s546 + $0x4c] sm:$0xf]
        %s567 = scalar_lea.vmem %s4, 1
        %v568 = vld [vmem:[%s567] sm:$0x1]
        %v570 = vlaneseq
        %v571 = vshrl.u32 %v570, 7
        %v572 = vsub.s32 0, %v571
        %v573 = vrot.slane %v568, %v572
        %v595 = vunpack.c.l.b16 %v547
        %v596 = vunpack.c.l.b16 %v548
        %v597 = vunpack.c.l.b16 %v549
        %v598 = vunpack.c.l.b16 %v550
        %v599 = vunpack.c.l.b16 %v551
        %v600 = vunpack.c.l.b16 %v552
        %v601 = vunpack.c.l.b16 %v553
        %v602 = vunpack.c.l.b16 %v554
        %v603 = vunpack.c.l.b16 %v555
        %v604 = vunpack.c.l.b16 %v556
        %v605 = vunpack.c.l.b16 %v557
        %v606 = vunpack.c.l.b16 %v558
        %v607 = vunpack.c.l.b16 %v559
        %v608 = vunpack.c.l.b16 %v560
        %v609 = vunpack.c.l.b16 %v561
        %v610 = vunpack.c.l.b16 %v562
        %v611 = vunpack.c.l.b16 %v563
        %v612 = vunpack.c.l.b16 %v564
        %v613 = vunpack.c.l.b16 %v565
        %v614 = vunpack.c.l.b16 %v566
        %v615 = vpack.c.b16 %v596, %v595
        %v616 = vpack.c.b16 %v598, %v597
        %v617 = vpack.c.b16 %v600, %v599
        %v618 = vpack.c.b16 %v602, %v601
        %v619 = vpack.c.b16 %v604, %v603
        %v620 = vpack.c.b16 %v606, %v605
        %v621 = vpack.c.b16 %v608, %v607
        %v622 = vpack.c.b16 %v610, %v609
        %v623 = vpack.c.b16 %v612, %v611
        %v624 = vpack.c.b16 %v614, %v613
        %v635 = vsel %vm376, %v530, 0
        %637 = vmatprep.subr.bf16.mxu0 0
        %638 = vmatpush1.bf16.msra.mxu0 %v615
        %639 = vmatprep.subr.bf16.mxu0 0
        %640 = vmatpush1.bf16.msra.mxu0 %v616
        %641 = vmatprep.subr.bf16.mxu0 0
        %642 = vmatpush1.bf16.msra.mxu0 %v617
        %643 = vmatprep.subr.bf16.mxu0 0
        %644 = vmatpush1.bf16.msra.mxu0 %v618
        %645 = vmatprep.subr.bf16.mxu0 0
        %646 = vmatpush1.bf16.msra.mxu0 %v619
        %647 = vmatprep.subr.bf16.mxu0 0
        %648 = vmatpush1.bf16.msra.mxu0 %v620
        %649 = vmatprep.subr.bf16.mxu0 0
        %650 = vmatpush1.bf16.msra.mxu0 %v621
        %651 = vmatprep.subr.bf16.mxu0 0
        %652 = vmatpush1.bf16.msra.mxu0 %v622
        %653 = vmatprep.subr.bf16.mxu0 0
        %654 = vmatpush1.bf16.msra.mxu0 %v623
        %655 = vmatprep.subr.bf16.mxu0 0
        %656 = vmatpush1.bf16.msra.mxu0 %v624
        %657 = vmatprep.subr.bf16.mxu0 0
        %658 = vmatpush1.bf16.msra.mxu0 0
        %659 = vmatprep.subr.bf16.mxu0 0
        %660 = vmatpush1.bf16.msra.mxu0 0
        %661 = vmatprep.subr.bf16.mxu0 0
        %662 = vmatpush1.bf16.msra.mxu0 0
        %663 = vmatprep.subr.bf16.mxu0 0
        %664 = vmatpush1.bf16.msra.mxu0 0
        %665 = vmatprep.subr.bf16.mxu0 0
        %666 = vmatpush1.bf16.msra.mxu0 0
        %667 = vmatprep.subr.bf16.mxu0 0
        %668 = vmatpush1.bf16.msra.mxu0 0
        %669 = vmatprep.mubr.bf16.mxu0 %v635
        %670 = vmatmul.mubr.bf16.gmra.mrb[0].mxu0 %v544
        %v671 = vpop.f32.mrb[0].mxu0
        %v672 = vadd.f32 %v573, %v671
        %v673 = vpop.f32.mrb[0].mxu0
        %v674 = vpop.f32.mrb[0].mxu0
        %v675 = vadd.f32 %v573, %v674
        %v676 = vpop.f32.mrb[0].mxu0
        %677 = vdwg.mxu0
        %v678 = vmax.f32 %v672, 0.0
        %v679 = vmax.f32 %v675, 0.0
        %v680 = vadd.f32 %v678, %v519
        %v681 = vadd.f32 %v679, %v520
        %v682 = vpack.c.bf16 %v681, %v680
        %v684 = vshrl.u32 %v682, 16
        %v686 = vrot.slane %v684, 7
        %v687 = vshll.u32 %v682, 16
        %v689 = vor.u32 %v686, %v687
        %v691 = vsel %vm359, 0, %v689
        %v692 = vrot.slane %v687, 1
        %v693 = vor.u32 %v684, %v692
        %v695 = vsel %vm366, %v693, 0
        %v697 = vrot.slane %v682, 6
        %v699 = vsel %vm341, 0, %v697
        %v700 = vrot.slane %v682, 2
        %v702 = vsel %vm346, %v700, 0
        %703 = vrot.lane.b32.xlu0 %v682, 32
        %v704 = vpop.permute.xlu0 %703
        %706 = vrot.lane.b32.xlu0 %v695, 64
        %v707 = vpop.permute.xlu0 %706
        %709 = vrot.lane.b32.xlu0 %v699, 96
        %v710 = vpop.permute.xlu0 %709
        %v713 = vsel %vm376, %v691, %v704
        %v715 = vsel %vm379, %v713, %v707
        %v717 = vsel %vm382, %v715, %v710
        %s719 = scalar_lea.vmem %s3, 160
        %v720 = vld [vmem:[%s719] sm:$0xf]
        %v721 = vld [vmem:[%s719 + $0x4] sm:$0xf]
        %v722 = vld [vmem:[%s719 + $0x8] sm:$0xf]
        %v723 = vld [vmem:[%s719 + $0xc] sm:$0xf]
        %v724 = vld [vmem:[%s719 + $0x10] sm:$0xf]
        %v725 = vld [vmem:[%s719 + $0x14] sm:$0xf]
        %v726 = vld [vmem:[%s719 + $0x18] sm:$0xf]
        %v727 = vld [vmem:[%s719 + $0x1c] sm:$0xf]
        %v728 = vld [vmem:[%s719 + $0x20] sm:$0xf]
        %v729 = vld [vmem:[%s719 + $0x24] sm:$0xf]
        %v730 = vld [vmem:[%s719 + $0x28] sm:$0xf]
        %v731 = vld [vmem:[%s719 + $0x2c] sm:$0xf]
        %v732 = vld [vmem:[%s719 + $0x30] sm:$0xf]
        %v733 = vld [vmem:[%s719 + $0x34] sm:$0xf]
        %v734 = vld [vmem:[%s719 + $0x38] sm:$0xf]
        %v735 = vld [vmem:[%s719 + $0x3c] sm:$0xf]
        %v736 = vld [vmem:[%s719 + $0x40] sm:$0xf]
        %v737 = vld [vmem:[%s719 + $0x44] sm:$0xf]
        %v738 = vld [vmem:[%s719 + $0x48] sm:$0xf]
        %v739 = vld [vmem:[%s719 + $0x4c] sm:$0xf]
        %s740 = scalar_lea.vmem %s4, 2
        %v741 = vld [vmem:[%s740] sm:$0x1]
        %v743 = vlaneseq
        %v744 = vshrl.u32 %v743, 7
        %v745 = vsub.s32 0, %v744
        %v746 = vrot.slane %v741, %v745
        %v768 = vunpack.c.l.b16 %v720
        %v769 = vunpack.c.l.b16 %v721
        %v770 = vunpack.c.l.b16 %v722
        %v771 = vunpack.c.l.b16 %v723
        %v772 = vunpack.c.l.b16 %v724
        %v773 = vunpack.c.l.b16 %v725
        %v774 = vunpack.c.l.b16 %v726
        %v775 = vunpack.c.l.b16 %v727
        %v776 = vunpack.c.l.b16 %v728
        %v777 = vunpack.c.l.b16 %v729
        %v778 = vunpack.c.l.b16 %v730
        %v779 = vunpack.c.l.b16 %v731
        %v780 = vunpack.c.l.b16 %v732
        %v781 = vunpack.c.l.b16 %v733
        %v782 = vunpack.c.l.b16 %v734
        %v783 = vunpack.c.l.b16 %v735
        %v784 = vunpack.c.l.b16 %v736
        %v785 = vunpack.c.l.b16 %v737
        %v786 = vunpack.c.l.b16 %v738
        %v787 = vunpack.c.l.b16 %v739
        %v788 = vpack.c.b16 %v769, %v768
        %v789 = vpack.c.b16 %v771, %v770
        %v790 = vpack.c.b16 %v773, %v772
        %v791 = vpack.c.b16 %v775, %v774
        %v792 = vpack.c.b16 %v777, %v776
        %v793 = vpack.c.b16 %v779, %v778
        %v794 = vpack.c.b16 %v781, %v780
        %v795 = vpack.c.b16 %v783, %v782
        %v796 = vpack.c.b16 %v785, %v784
        %v797 = vpack.c.b16 %v787, %v786
        %v808 = vsel %vm376, %v702, 0
        %810 = vmatprep.subr.bf16.mxu0 0
        %811 = vmatpush1.bf16.msra.mxu0 %v788
        %812 = vmatprep.subr.bf16.mxu0 0
        %813 = vmatpush1.bf16.msra.mxu0 %v789
        %814 = vmatprep.subr.bf16.mxu0 0
        %815 = vmatpush1.bf16.msra.mxu0 %v790
        %816 = vmatprep.subr.bf16.mxu0 0
        %817 = vmatpush1.bf16.msra.mxu0 %v791
        %818 = vmatprep.subr.bf16.mxu0 0
        %819 = vmatpush1.bf16.msra.mxu0 %v792
        %820 = vmatprep.subr.bf16.mxu0 0
        %821 = vmatpush1.bf16.msra.mxu0 %v793
        %822 = vmatprep.subr.bf16.mxu0 0
        %823 = vmatpush1.bf16.msra.mxu0 %v794
        %824 = vmatprep.subr.bf16.mxu0 0
        %825 = vmatpush1.bf16.msra.mxu0 %v795
        %826 = vmatprep.subr.bf16.mxu0 0
        %827 = vmatpush1.bf16.msra.mxu0 %v796
        %828 = vmatprep.subr.bf16.mxu0 0
        %829 = vmatpush1.bf16.msra.mxu0 %v797
        %830 = vmatprep.subr.bf16.mxu0 0
        %831 = vmatpush1.bf16.msra.mxu0 0
        %832 = vmatprep.subr.bf16.mxu0 0
        %833 = vmatpush1.bf16.msra.mxu0 0
        %834 = vmatprep.subr.bf16.mxu0 0
        %835 = vmatpush1.bf16.msra.mxu0 0
        %836 = vmatprep.subr.bf16.mxu0 0
        %837 = vmatpush1.bf16.msra.mxu0 0
        %838 = vmatprep.subr.bf16.mxu0 0
        %839 = vmatpush1.bf16.msra.mxu0 0
        %840 = vmatprep.subr.bf16.mxu0 0
        %841 = vmatpush1.bf16.msra.mxu0 0
        %842 = vmatprep.mubr.bf16.mxu0 %v808
        %843 = vmatmul.mubr.bf16.gmra.mrb[0].mxu0 %v717
        %v844 = vpop.f32.mrb[0].mxu0
        %v845 = vadd.f32 %v746, %v844
        %v846 = vpop.f32.mrb[0].mxu0
        %v847 = vpop.f32.mrb[0].mxu0
        %v848 = vadd.f32 %v746, %v847
        %v849 = vpop.f32.mrb[0].mxu0
        %850 = vdwg.mxu0
        %v851 = vmax.f32 %v845, 0.0
        %v852 = vmax.f32 %v848, 0.0
        %v853 = vadd.f32 %v851, %v680
        %v854 = vadd.f32 %v852, %v681
        %v855 = vpack.c.bf16 %v854, %v853
        %v856 = vld [vmem:[%s5] sm:$0xf]
        %v857 = vld [vmem:[%s5 + $0x4] sm:$0xf]
        %v858 = vld [vmem:[%s5 + $0x8] sm:$0xf]
        %v859 = vld [vmem:[%s5 + $0xc] sm:$0xf]
        %v860 = vld [vmem:[%s6] sm:$0x1]
        %v862 = vlaneseq
        %v863 = vshrl.u32 %v862, 7
        %v864 = vsub.s32 0, %v863
        %v865 = vrot.slane %v860, %v864
        %v871 = vunpack.c.l.b16 %v856
        %v872 = vunpack.c.l.b16 %v857
        %v873 = vunpack.c.l.b16 %v858
        %v874 = vunpack.c.l.b16 %v859
        %v875 = vpack.c.b16 %v872, %v871
        %v876 = vpack.c.b16 %v874, %v873
        %v880 = vsel %vm376, %v855, 0
        %882 = vmatprep.subr.bf16.mxu0 0
        %883 = vmatpush1.bf16.msra.mxu0 %v875
        %884 = vmatprep.subr.bf16.mxu0 0
        %885 = vmatpush1.bf16.msra.mxu0 %v876
        %886 = vmatprep.subr.bf16.mxu0 0
        %887 = vmatpush1.bf16.msra.mxu0 0
        %888 = vmatprep.subr.bf16.mxu0 0
        %889 = vmatpush1.bf16.msra.mxu0 0
        %890 = vmatprep.subr.bf16.mxu0 0
        %891 = vmatpush1.bf16.msra.mxu0 0
        %892 = vmatprep.subr.bf16.mxu0 0
        %893 = vmatpush1.bf16.msra.mxu0 0
        %894 = vmatprep.subr.bf16.mxu0 0
        %895 = vmatpush1.bf16.msra.mxu0 0
        %896 = vmatprep.subr.bf16.mxu0 0
        %897 = vmatpush1.bf16.msra.mxu0 0
        %898 = vmatprep.subr.bf16.mxu0 0
        %899 = vmatpush1.bf16.msra.mxu0 0
        %900 = vmatprep.subr.bf16.mxu0 0
        %901 = vmatpush1.bf16.msra.mxu0 0
        %902 = vmatprep.subr.bf16.mxu0 0
        %903 = vmatpush1.bf16.msra.mxu0 0
        %904 = vmatprep.subr.bf16.mxu0 0
        %905 = vmatpush1.bf16.msra.mxu0 0
        %906 = vmatprep.subr.bf16.mxu0 0
        %907 = vmatpush1.bf16.msra.mxu0 0
        %908 = vmatprep.subr.bf16.mxu0 0
        %909 = vmatpush1.bf16.msra.mxu0 0
        %910 = vmatprep.subr.bf16.mxu0 0
        %911 = vmatpush1.bf16.msra.mxu0 0
        %912 = vmatprep.subr.bf16.mxu0 0
        %913 = vmatpush1.bf16.msra.mxu0 0
        %914 = vmatprep.mubr.bf16.mxu0 0
        %915 = vmatmul.mubr.bf16.gmra.mrb[0].mxu0 %v880
        %v916 = vpop.f32.mrb[0].mxu0
        %v917 = vadd.f32 %v865, %v916
        %v918 = vpop.f32.mrb[0].mxu0
        %v919 = vpop.f32.mrb[0].mxu0
        %v920 = vadd.f32 %v865, %v919
        %v921 = vpop.f32.mrb[0].mxu0
        %922 = vdwg.mxu0
        %923 = vst [vmem:[%s271] sm:$0xff] %v917
        %924 = vst [vmem:[%s271 + $0x8] sm:$0xff] %v920
        %s925 = sand.u32 %s181, 1
        %s926 = scalar_lea.sflag [#allocation3], %s925
        %s927 = sand.u32 %s181, 1
        %s928 = smul.addr %s927, 16
        %s929 = scalar_lea.vmem [#allocation2], %s928
        // Predicated region
        $region49: #{tpu_custom_call.1} parent=47 // pred_check
          %p930 = pneg %p191
        $region50: #{tpu_custom_call.1} parent=47 // pred_check_branch
          %932 = sbr.rel (%p930) target = $region52
        $region51: #{tpu_custom_call.1} parent=47 // pred_region
          %s934 = ssub.s32 256, 256
          %935 = vsyncadd %s926, %s934
          %s936 = smul.addr %s21, 2
          %s937 = smul.addr %s936, 128
          %s938 = scalar_lea.hbm %s7, %s937
          %s939 = sshll.u32 %s929, 4
          %s940 = int_to_ptr.vmem [resolvable:$true] %s939
          %945 = dma.vmem_to_hbm [thread:$0]  %s940, 256, %s938, %s926, 128, 128, 8
        $region52: #{tpu_custom_call.1} parent=47 // pred_fallthru
          _
      $region48: #{tpu_custom_call.1} parent=5 // pred_fallthru
        _
      %p946 = scmp.le.s32.totalorder 2, %s16
      // Predicated region
      $region53: #{tpu_custom_call.1} parent=5 // pred_check
        %p947 = pneg %p946
      $region54: #{tpu_custom_call.1} parent=5 // pred_check_branch
        %949 = sbr.rel (%p947) target = $region56
      $region55: #{tpu_custom_call.1} parent=5 // pred_region
        %s950 = ssub.s32 %s16, 2
        // Predicated region
        $region57: #{tpu_custom_call.1} parent=55 // pred_check
          %p951 = pneg %p197
        $region58: #{tpu_custom_call.1} parent=55 // pred_check_branch
          %953 = sbr.rel (%p951) target = $region60
        $region59: #{tpu_custom_call.1} parent=55 // pred_region
          %s954 = sand.u32 %s182, 1
          %s955 = scalar_lea.sflag [#allocation3], %s954
          %s956 = sand.u32 %s182, 1
          %s957 = smul.addr %s956, 16
          %s958 = scalar_lea.vmem [#allocation2], %s957
          %959 = dma.done %s955, 256
        $region60: #{tpu_custom_call.1} parent=55 // pred_fallthru
          _
      $region56: #{tpu_custom_call.1} parent=5 // pred_fallthru
        _
    $region6: #{tpu_custom_call.1} parent=1 // loop_footer
      %s20 = sadd.s32 1, %s16
    $region7: #{tpu_custom_call.1} parent=1 // loop_footer_branch
      %15 = sbr.rel target = $region3
    $region8: #{tpu_custom_call.1} parent=1 // loop_exit
      _
    %960 = vsyncpa [#allocation3], 1
    %s961 = scalar_lea.sflag [#allocation3], 1
    %962 = vsyncpa %s961, 1

</llo_original>
